<compile_context>
chip_gen: v7x
topology: tpu7x:2x2x1
jax: 0.10.0
libtpu: 0.0.40
codegen_flags: <defaults>
</compile_context>

<pallas_src>
from functools import partial

import jax
import jax.numpy as jnp
from jax.experimental import pallas as pl
from jax.experimental.pallas import tpu as pltpu


def _round_up(x, m):
    return (x + m - 1) // m * m


def _batch_fold_factor(batch):
    """Fold the whole batch into one grid step on single-TensorCore chips
    (v5e / v6e); keep one image per step on multi-TC chips (v7x, megacore)
    so dimension_semantics=('parallel',) shards images across cores."""
    try:
        kind = jax.devices()[0].device_kind.lower()
    except Exception:
        return 1
    single_tc = ("lite" in kind) or ("v5e" in kind) or ("v6e" in kind)
    return batch if single_tc else 1


def prepare_generator_params(params, C):
    """One-time im2col weight packing (call once, outside the forward path)."""
    w1, b1 = params["w1"].astype(jnp.float32), params["b1"].astype(jnp.float32)
    w2, b2 = params["w2"].astype(jnp.float32), params["b2"].astype(jnp.float32)
    Cin1, Hid = w1.shape[2], w1.shape[3]          # C+1 real input channels
    assert Cin1 == C + 1 and w2.shape[3] == C
    Cg = _round_up(Cin1 + 1, 8)                   # +1 ones (bias) channel
    Hg = _round_up(Hid, 8)

    # conv1: bias folded into the center-tap column of the ones channel.
    w1e = jnp.zeros((3, 3, Cg, Hg), jnp.float32)
    w1e = w1e.at[:, :, :Cin1, :Hid].set(w1)
    w1e = w1e.at[1, 1, Cin1, :Hid].set(b1)
    w1g = w1e.transpose(3, 0, 1, 2).reshape(Hg, 9 * Cg).astype(jnp.bfloat16)

    # conv2: kept in f32 (tiny K); bias stays a small (C,1) input.
    w2e = jnp.zeros((3, 3, Hg, C), jnp.float32)
    w2e = w2e.at[:, :, :Hid, :].set(w2)
    w2g = w2e.transpose(3, 0, 1, 2).reshape(C, 9 * Hg)
    b2g = b2.reshape(C, 1)
    return {"w1g": w1g, "w2g": w2g, "b2g": b2g}


def _generator_kernel(x_ref, a_ref, w1_ref, w2_ref, b2_ref, o_ref,
                      *, H, W, C, Cg, Hg, Bblk, GAP):
    HW = H * W
    seg = HW + GAP                        # per-image lane stride (image + gap)
    N = Bblk * HW + (Bblk - 1) * GAP      # working (matmul) lane width
    Wp = GAP + N + GAP                    # halo-padded lane width
    f32 = jnp.float32

    # Column / in-image masks on the packed lane axis (computed once).
    pos = jax.lax.broadcasted_iota(jnp.int32, (1, N), 1) % seg
    col = pos % W
    mask_l = (col >= 1).astype(f32)       # valid when tap reads column j-1
    mask_r = (col <= W - 2).astype(f32)   # valid when tap reads column j+1

    def im2col(src, dtype):
        # src: (R, Wp) with zero halos/gaps; returns (9*R, N) taps in `dtype`
        # with K ordered (ky, kx, cin) to match the packed weights.
        ml, mr = mask_l.astype(dtype), mask_r.astype(dtype)
        taps = []
        for dy in (-1, 0, 1):
            for dx in (-1, 0, 1):
                start = GAP + dy * W + dx            # static halo offset
                t = src[:, start:start + N].astype(dtype)
                if dx == -1:
                    t = t * ml
                elif dx == 1:
                    t = t * mr
                taps.append(t)
        return jnp.concatenate(taps, axis=0)

    # ---- pack x / attention channel-major with zero halos/gaps, in-kernel ---
    zx = jnp.zeros((C, GAP), f32)
    za = jnp.zeros((1, GAP), f32)
    xparts, aparts = [zx], [za]
    for b in range(Bblk):
        xparts += [x_ref[b], zx]
        aparts += [a_ref[b], za]
    rows = [jnp.concatenate(xparts, axis=1),         # (C, Wp) image channels
            jnp.concatenate(aparts, axis=1),         # (1, Wp) attention
            jnp.ones((1, Wp), f32)]                  # (1, Wp) bias channel
    if Cg > C + 2:
        rows.append(jnp.zeros((Cg - C - 2, Wp), f32))
    packed = jnp.concatenate(rows, axis=0)           # (Cg, Wp)

    # ---- conv1 (3x3 same) + ReLU: one bf16 MXU matmul, bias folded in w1 ----
    p1 = im2col(packed, jnp.bfloat16)                # (9*Cg, N)
    h = jnp.dot(w1_ref[...], p1, preferred_element_type=f32)    # (Hg, N)
    h = jnp.maximum(h, 0.0)
    if Bblk > 1:
        h = h * (pos < HW).astype(f32)               # zero inter-image gaps

    # ---- conv2 (3x3 same) + tanh, kept in f32 (K is tiny) -------------------
    zh = jnp.zeros((Hg, GAP), f32)
    hp = jnp.concatenate([zh, h, zh], axis=1)        # (Hg, Wp)
    p2 = im2col(hp, f32)                             # (9*Hg, N)
    r = jnp.dot(w2_ref[...], p2, preferred_element_type=f32)    # (C, N)
    r = jnp.tanh(r + b2_ref[...])

    # ---- attention-guided residual; lane-dense (C, H*W) stores --------------
    for b in range(Bblk):
        off = b * seg                                # multiple of 128
        o_ref[b] = x_ref[b] + a_ref[b] * r[:, off:off + HW]


def model_forward(input_nchw, attention_map_nchw, packed):
    """Equivalent of Model.forward(input, attention_map). NCHW in, NCHW out."""
    x = input_nchw.astype(jnp.float32)               # (B, C, H, W)
    a = attention_map_nchw.astype(jnp.float32)       # (B, 1, H, W)
    B, C, H, W = x.shape
    HW = H * W
    w1g, w2g, b2g = packed["w1g"], packed["w2g"], packed["b2g"]
    Hg = w1g.shape[0]
    Cg = w1g.shape[1] // 9
    GAP = _round_up(W + 1, 128)                      # lane-aligned halo / gap
    Bblk = _batch_fold_factor(B)                     # B on v5e/v6e, 1 on v7x
    grid = (B // Bblk,)

    x3 = x.reshape(B, C, HW)                         # free reshapes only
    a3 = a.reshape(B, 1, HW)

    kernel = partial(_generator_kernel, H=H, W=W, C=C, Cg=Cg, Hg=Hg,
                     Bblk=Bblk, GAP=GAP)

    cost = pl.CostEstimate(
        flops=2 * B * HW * 9 * (Hg * Cg + C * Hg),
        transcendentals=B * HW * C,
        bytes_accessed=4 * B * HW * (2 * C + 1)
        + w1g.size * 2 + w2g.size * 4 + b2g.size * 4,
    )

    out = pl.pallas_call(
        kernel,
        out_shape=jax.ShapeDtypeStruct((B, C, HW), jnp.float32),
        grid_spec=pltpu.PrefetchScalarGridSpec(
            num_scalar_prefetch=0,
            grid=grid,
            in_specs=[
                pl.BlockSpec((Bblk, C, HW), lambda g: (g, 0, 0)),
                pl.BlockSpec((Bblk, 1, HW), lambda g: (g, 0, 0)),
                pl.BlockSpec((Hg, 9 * Cg), lambda g: (0, 0)),
                pl.BlockSpec((C, 9 * Hg), lambda g: (0, 0)),
                pl.BlockSpec((C, 1), lambda g: (0, 0)),
            ],
            out_specs=pl.BlockSpec((Bblk, C, HW), lambda g: (g, 0, 0)),
        ),
        compiler_params=pltpu.CompilerParams(
            dimension_semantics=("parallel",)),
        cost_estimate=cost,
    )(x3, a3, w1g, w2g, b2g)

    return out.reshape(B, C, H, W)                   # already NCHW


def _reference_nchw(x_nchw, attn_nchw, params):
    """Pure-JAX f32 reference (lax conv) for correctness check."""
    x = jnp.transpose(x_nchw, (0, 2, 3, 1)).astype(jnp.float32)
    a = jnp.transpose(attn_nchw, (0, 2, 3, 1)).astype(jnp.float32)
    xcat = jnp.concatenate([x, a], axis=-1)
    h = jax.lax.conv_general_dilated(
        xcat, params["w1"], (1, 1), "SAME",
        dimension_numbers=("NHWC", "HWIO", "NHWC")) + params["b1"]
    h = jnp.maximum(h, 0.0)
    r = jax.lax.conv_general_dilated(
        h, params["w2"], (1, 1), "SAME",
        dimension_numbers=("NHWC", "HWIO", "NHWC")) + params["b2"]
    r = jnp.tanh(r)
    y = x + a * r
    return jnp.transpose(y, (0, 3, 1, 2))


if __name__ == "__main__":
    key = jax.random.PRNGKey(0)
    B, C, H, W = 2, 4, 16, 16
    HID = 8

    k = jax.random.split(key, 6)
    x_nchw = jax.random.normal(k[0], (B, C, H, W), jnp.float32)
    attn_nchw = jax.nn.sigmoid(
        jax.random.normal(k[1], (B, 1, H, W), jnp.float32))

    # Deterministic generator parameters (3x3 conv weights, HWIO layout).
    params = {
        "w1": 0.1 * jax.random.normal(k[2], (3, 3, C + 1, HID), jnp.float32),
        "b1": 0.01 * jax.random.normal(k[3], (HID,), jnp.float32),
        "w2": 0.1 * jax.random.normal(k[4], (3, 3, HID, C), jnp.float32),
        "b2": 0.01 * jax.random.normal(k[5], (C,), jnp.float32),
    }

    # One-time weight packing (hoisted out of the per-call path).
    packed = prepare_generator_params(params, C)
    packed = jax.tree_util.tree_map(jax.block_until_ready, packed)

    fwd = jax.jit(model_forward)
    out = fwd(x_nchw, attn_nchw, packed)
    out = jax.block_until_ready(out)
    assert out.shape == (B, C, H, W)

    # Correctness vs. pure-JAX f32 reference (tolerance covers the bf16 MXU
    # path of conv1; conv2 is f32, expected max error is a few 1e-3).
    ref = _reference_nchw(x_nchw, attn_nchw, params)
    err = jnp.max(jnp.abs(out - ref))
    assert err < 2e-2, f"max abs err {err}"

    print("KERNEL_OK")
</pallas_src>

<mosaic_0001>
module attributes {stable_mosaic.version = 11 : i64} {
  func.func @_generator_kernel(%arg0: i32, %arg1: memref<1x4x256xf32, #tpu.memory_space<vmem>>, %arg2: memref<1x1x256xf32, #tpu.memory_space<vmem>>, %arg3: memref<8x72xbf16, #tpu.memory_space<vmem>>, %arg4: memref<4x72xf32, #tpu.memory_space<vmem>>, %arg5: memref<4x1xf32, #tpu.memory_space<vmem>>, %arg6: memref<1x4x256xf32, #tpu.memory_space<vmem>>) attributes {dimension_semantics = [#tpu.dimension_semantics<parallel>], iteration_bounds = array<i64: 2>, scalar_prefetch = 0 : i64, scratch_operands = 0 : i64, tpu.core_type = #tpu.core_type<tc>, window_params = [{transform_indices = @transform_0, window_bounds = array<i64: 1, 4, 256>}, {transform_indices = @transform_1, window_bounds = array<i64: 1, 1, 256>}, {pipeline_mode = #tpu.pipeline_mode<synchronous>, transform_indices = @transform_2, window_bounds = array<i64: 8, 72>}, {pipeline_mode = #tpu.pipeline_mode<synchronous>, transform_indices = @transform_3, window_bounds = array<i64: 4, 72>}, {pipeline_mode = #tpu.pipeline_mode<synchronous>, transform_indices = @transform_4, window_bounds = array<i64: 4, 1>}, {transform_indices = @transform_5, window_bounds = array<i64: 1, 4, 256>}]} {
    %0 = tpu.iota {dimensions = array<i32: 1>} : vector<1x256xi32>
    %c384_i32 = arith.constant 384 : i32
    %c0_i32 = arith.constant 0 : i32
    %1 = arith.cmpi eq, %c384_i32, %c0_i32 : i32
    %c1_i32 = arith.constant 1 : i32
    %2 = arith.select %1, %c1_i32, %c384_i32 : i32
    %3 = vector.broadcast %2 : i32 to vector<1x256xi32>
    %4 = arith.remsi %0, %3 : vector<1x256xi32>
    %c0_i32_0 = arith.constant 0 : i32
    %5 = vector.broadcast %c0_i32_0 : i32 to vector<1x256xi32>
    %6 = arith.cmpi ne, %4, %5 : vector<1x256xi32>
    %c0_i32_1 = arith.constant 0 : i32
    %7 = vector.broadcast %c0_i32_1 : i32 to vector<1x256xi32>
    %8 = arith.cmpi slt, %4, %7 : vector<1x256xi32>
    %c0_i32_2 = arith.constant 0 : i32
    %9 = arith.cmpi slt, %2, %c0_i32_2 : i32
    %10 = vector.broadcast %9 : i1 to vector<1x256xi1>
    %11 = vector.broadcast %10 : vector<1x256xi1> to vector<1x256xi1>
    %12 = arith.xori %8, %11 : vector<1x256xi1>
    %13 = arith.andi %12, %6 : vector<1x256xi1>
    %14 = vector.broadcast %2 : i32 to vector<1x256xi32>
    %15 = arith.addi %4, %14 : vector<1x256xi32>
    %16 = arith.select %13, %15, %4 : vector<1x256xi1>, vector<1x256xi32>
    %c16_i32 = arith.constant 16 : i32
    %c0_i32_3 = arith.constant 0 : i32
    %17 = arith.cmpi eq, %c16_i32, %c0_i32_3 : i32
    %c1_i32_4 = arith.constant 1 : i32
    %18 = arith.select %17, %c1_i32_4, %c16_i32 : i32
    %19 = vector.broadcast %18 : i32 to vector<1x256xi32>
    %20 = arith.remsi %16, %19 : vector<1x256xi32>
    %c0_i32_5 = arith.constant 0 : i32
    %21 = vector.broadcast %c0_i32_5 : i32 to vector<1x256xi32>
    %22 = arith.cmpi ne, %20, %21 : vector<1x256xi32>
    %c0_i32_6 = arith.constant 0 : i32
    %23 = vector.broadcast %c0_i32_6 : i32 to vector<1x256xi32>
    %24 = arith.cmpi slt, %20, %23 : vector<1x256xi32>
    %c0_i32_7 = arith.constant 0 : i32
    %25 = arith.cmpi slt, %18, %c0_i32_7 : i32
    %26 = vector.broadcast %25 : i1 to vector<1x256xi1>
    %27 = vector.broadcast %26 : vector<1x256xi1> to vector<1x256xi1>
    %28 = arith.xori %24, %27 : vector<1x256xi1>
    %29 = arith.andi %28, %22 : vector<1x256xi1>
    %30 = vector.broadcast %18 : i32 to vector<1x256xi32>
    %31 = arith.addi %20, %30 : vector<1x256xi32>
    %32 = arith.select %29, %31, %20 : vector<1x256xi1>, vector<1x256xi32>
    %c1_i32_8 = arith.constant 1 : i32
    %33 = vector.broadcast %c1_i32_8 : i32 to vector<1x256xi32>
    %34 = arith.cmpi sge, %32, %33 : vector<1x256xi32>
    %35 = arith.extui %34 : vector<1x256xi1> to vector<1x256xi32>
    %36 = arith.sitofp %35 : vector<1x256xi32> to vector<1x256xf32>
    %c14_i32 = arith.constant 14 : i32
    %37 = vector.broadcast %c14_i32 : i32 to vector<1x256xi32>
    %38 = arith.cmpi sle, %32, %37 : vector<1x256xi32>
    %39 = arith.extui %38 : vector<1x256xi1> to vector<1x256xi32>
    %40 = arith.sitofp %39 : vector<1x256xi32> to vector<1x256xf32>
    %cst = arith.constant 0.000000e+00 : f32
    %41 = vector.broadcast %cst : f32 to vector<4x128xf32>
    %cst_9 = arith.constant 0.000000e+00 : f32
    %42 = vector.broadcast %cst_9 : f32 to vector<1x128xf32>
    %c0 = arith.constant 0 : index
    %c0_10 = arith.constant 0 : index
    %c0_11 = arith.constant 0 : index
    %43 = vector.load %arg1[%c0, %c0_10, %c0_11] : memref<1x4x256xf32, #tpu.memory_space<vmem>>, vector<1x4x256xf32>
    %44 = vector.shape_cast %43 : vector<1x4x256xf32> to vector<4x256xf32>
    %c0_12 = arith.constant 0 : index
    %c0_13 = arith.constant 0 : index
    %c0_14 = arith.constant 0 : index
    %45 = vector.load %arg2[%c0_12, %c0_13, %c0_14] : memref<1x1x256xf32, #tpu.memory_space<vmem>>, vector<1x1x256xf32>
    %46 = vector.shape_cast %45 : vector<1x1x256xf32> to vector<1x256xf32>
    %47 = tpu.concatenate %41, %44, %41 in 1 : vector<4x128xf32>, vector<4x256xf32>, vector<4x128xf32> -> vector<4x512xf32>
    %48 = tpu.concatenate %42, %46, %42 in 1 : vector<1x128xf32>, vector<1x256xf32>, vector<1x128xf32> -> vector<1x512xf32>
    %cst_15 = arith.constant 1.000000e+00 : f32
    %49 = vector.broadcast %cst_15 : f32 to vector<1x512xf32>
    %cst_16 = arith.constant 0.000000e+00 : f32
    %50 = vector.broadcast %cst_16 : f32 to vector<2x512xf32>
    %51 = tpu.concatenate %47, %48, %49, %50 in 0 : vector<4x512xf32>, vector<1x512xf32>, vector<1x512xf32>, vector<2x512xf32> -> vector<8x512xf32>
    %52 = arith.truncf %36 : vector<1x256xf32> to vector<1x256xbf16>
    %53 = arith.truncf %40 : vector<1x256xf32> to vector<1x256xbf16>
    %54 = vector.extract_strided_slice %51 {offsets = [0, 111], sizes = [8, 256], strides = [1, 1]} : vector<8x512xf32> to vector<8x256xf32>
    %55 = arith.truncf %54 : vector<8x256xf32> to vector<8x256xbf16>
    %56 = vector.broadcast %52 : vector<1x256xbf16> to vector<8x256xbf16>
    %57 = arith.mulf %55, %56 : vector<8x256xbf16>
    %58 = vector.extract_strided_slice %51 {offsets = [0, 112], sizes = [8, 256], strides = [1, 1]} : vector<8x512xf32> to vector<8x256xf32>
    %59 = arith.truncf %58 : vector<8x256xf32> to vector<8x256xbf16>
    %60 = vector.extract_strided_slice %51 {offsets = [0, 113], sizes = [8, 256], strides = [1, 1]} : vector<8x512xf32> to vector<8x256xf32>
    %61 = arith.truncf %60 : vector<8x256xf32> to vector<8x256xbf16>
    %62 = vector.broadcast %53 : vector<1x256xbf16> to vector<8x256xbf16>
    %63 = arith.mulf %61, %62 : vector<8x256xbf16>
    %64 = vector.extract_strided_slice %51 {offsets = [0, 127], sizes = [8, 256], strides = [1, 1]} : vector<8x512xf32> to vector<8x256xf32>
    %65 = arith.truncf %64 : vector<8x256xf32> to vector<8x256xbf16>
    %66 = vector.broadcast %52 : vector<1x256xbf16> to vector<8x256xbf16>
    %67 = arith.mulf %65, %66 : vector<8x256xbf16>
    %68 = vector.extract_strided_slice %51 {offsets = [0, 128], sizes = [8, 256], strides = [1, 1]} : vector<8x512xf32> to vector<8x256xf32>
    %69 = arith.truncf %68 : vector<8x256xf32> to vector<8x256xbf16>
    %70 = vector.extract_strided_slice %51 {offsets = [0, 129], sizes = [8, 256], strides = [1, 1]} : vector<8x512xf32> to vector<8x256xf32>
    %71 = arith.truncf %70 : vector<8x256xf32> to vector<8x256xbf16>
    %72 = vector.broadcast %53 : vector<1x256xbf16> to vector<8x256xbf16>
    %73 = arith.mulf %71, %72 : vector<8x256xbf16>
    %74 = vector.extract_strided_slice %51 {offsets = [0, 143], sizes = [8, 256], strides = [1, 1]} : vector<8x512xf32> to vector<8x256xf32>
    %75 = arith.truncf %74 : vector<8x256xf32> to vector<8x256xbf16>
    %76 = vector.broadcast %52 : vector<1x256xbf16> to vector<8x256xbf16>
    %77 = arith.mulf %75, %76 : vector<8x256xbf16>
    %78 = vector.extract_strided_slice %51 {offsets = [0, 144], sizes = [8, 256], strides = [1, 1]} : vector<8x512xf32> to vector<8x256xf32>
    %79 = arith.truncf %78 : vector<8x256xf32> to vector<8x256xbf16>
    %80 = vector.extract_strided_slice %51 {offsets = [0, 145], sizes = [8, 256], strides = [1, 1]} : vector<8x512xf32> to vector<8x256xf32>
    %81 = arith.truncf %80 : vector<8x256xf32> to vector<8x256xbf16>
    %82 = vector.broadcast %53 : vector<1x256xbf16> to vector<8x256xbf16>
    %83 = arith.mulf %81, %82 : vector<8x256xbf16>
    %84 = tpu.concatenate %57, %59, %63, %67, %69, %73, %77, %79, %83 in 0 : vector<8x256xbf16>, vector<8x256xbf16>, vector<8x256xbf16>, vector<8x256xbf16>, vector<8x256xbf16>, vector<8x256xbf16>, vector<8x256xbf16>, vector<8x256xbf16>, vector<8x256xbf16> -> vector<72x256xbf16>
    %c0_17 = arith.constant 0 : index
    %c0_18 = arith.constant 0 : index
    %85 = vector.load %arg3[%c0_17, %c0_18] : memref<8x72xbf16, #tpu.memory_space<vmem>>, vector<8x72xbf16>
    %cst_19 = arith.constant dense<0.000000e+00> : vector<8x256xf32>
    %86 = tpu.matmul %85, %84, %cst_19 {dimension_numbers = #tpu.dot_dimension_numbers<[1], [0], [0], [1], [0, 0, 1, 1], [], []>} : vector<8x72xbf16>, vector<72x256xbf16>, vector<8x256xf32> -> vector<8x256xf32>
    %cst_20 = arith.constant 0.000000e+00 : f32
    %87 = vector.broadcast %cst_20 : f32 to vector<8x256xf32>
    %88 = arith.maximumf %86, %87 : vector<8x256xf32>
    %cst_21 = arith.constant 0.000000e+00 : f32
    %89 = vector.broadcast %cst_21 : f32 to vector<8x128xf32>
    %90 = tpu.concatenate %89, %88, %89 in 1 : vector<8x128xf32>, vector<8x256xf32>, vector<8x128xf32> -> vector<8x512xf32>
    %91 = vector.extract_strided_slice %90 {offsets = [0, 111], sizes = [8, 256], strides = [1, 1]} : vector<8x512xf32> to vector<8x256xf32>
    %92 = vector.broadcast %36 : vector<1x256xf32> to vector<8x256xf32>
    %93 = arith.mulf %91, %92 : vector<8x256xf32>
    %94 = vector.extract_strided_slice %90 {offsets = [0, 112], sizes = [8, 256], strides = [1, 1]} : vector<8x512xf32> to vector<8x256xf32>
    %95 = vector.extract_strided_slice %90 {offsets = [0, 113], sizes = [8, 256], strides = [1, 1]} : vector<8x512xf32> to vector<8x256xf32>
    %96 = vector.broadcast %40 : vector<1x256xf32> to vector<8x256xf32>
    %97 = arith.mulf %95, %96 : vector<8x256xf32>
    %98 = vector.extract_strided_slice %90 {offsets = [0, 127], sizes = [8, 256], strides = [1, 1]} : vector<8x512xf32> to vector<8x256xf32>
    %99 = vector.broadcast %36 : vector<1x256xf32> to vector<8x256xf32>
    %100 = arith.mulf %98, %99 : vector<8x256xf32>
    %101 = vector.extract_strided_slice %90 {offsets = [0, 128], sizes = [8, 256], strides = [1, 1]} : vector<8x512xf32> to vector<8x256xf32>
    %102 = vector.extract_strided_slice %90 {offsets = [0, 129], sizes = [8, 256], strides = [1, 1]} : vector<8x512xf32> to vector<8x256xf32>
    %103 = vector.broadcast %40 : vector<1x256xf32> to vector<8x256xf32>
    %104 = arith.mulf %102, %103 : vector<8x256xf32>
    %105 = vector.extract_strided_slice %90 {offsets = [0, 143], sizes = [8, 256], strides = [1, 1]} : vector<8x512xf32> to vector<8x256xf32>
    %106 = vector.broadcast %36 : vector<1x256xf32> to vector<8x256xf32>
    %107 = arith.mulf %105, %106 : vector<8x256xf32>
    %108 = vector.extract_strided_slice %90 {offsets = [0, 144], sizes = [8, 256], strides = [1, 1]} : vector<8x512xf32> to vector<8x256xf32>
    %109 = vector.extract_strided_slice %90 {offsets = [0, 145], sizes = [8, 256], strides = [1, 1]} : vector<8x512xf32> to vector<8x256xf32>
    %110 = vector.broadcast %40 : vector<1x256xf32> to vector<8x256xf32>
    %111 = arith.mulf %109, %110 : vector<8x256xf32>
    %112 = tpu.concatenate %93, %94, %97, %100, %101, %104, %107, %108, %111 in 0 : vector<8x256xf32>, vector<8x256xf32>, vector<8x256xf32>, vector<8x256xf32>, vector<8x256xf32>, vector<8x256xf32>, vector<8x256xf32>, vector<8x256xf32>, vector<8x256xf32> -> vector<72x256xf32>
    %c0_22 = arith.constant 0 : index
    %c0_23 = arith.constant 0 : index
    %113 = vector.load %arg4[%c0_22, %c0_23] : memref<4x72xf32, #tpu.memory_space<vmem>>, vector<4x72xf32>
    %cst_24 = arith.constant dense<0.000000e+00> : vector<4x256xf32>
    %114 = tpu.matmul %113, %112, %cst_24 {dimension_numbers = #tpu.dot_dimension_numbers<[1], [0], [0], [1], [0, 0, 1, 1], [], []>} : vector<4x72xf32>, vector<72x256xf32>, vector<4x256xf32> -> vector<4x256xf32>
    %c0_25 = arith.constant 0 : index
    %c0_26 = arith.constant 0 : index
    %115 = vector.load %arg5[%c0_25, %c0_26] : memref<4x1xf32, #tpu.memory_space<vmem>>, vector<4x1xf32>
    %116 = vector.broadcast %115 : vector<4x1xf32> to vector<4x256xf32>
    %117 = arith.addf %114, %116 : vector<4x256xf32>
    %118 = math.tanh %117 : vector<4x256xf32>
    %c0_27 = arith.constant 0 : index
    %c0_28 = arith.constant 0 : index
    %c0_29 = arith.constant 0 : index
    %119 = vector.load %arg1[%c0_27, %c0_28, %c0_29] : memref<1x4x256xf32, #tpu.memory_space<vmem>>, vector<1x4x256xf32>
    %120 = vector.shape_cast %119 : vector<1x4x256xf32> to vector<4x256xf32>
    %c0_30 = arith.constant 0 : index
    %c0_31 = arith.constant 0 : index
    %c0_32 = arith.constant 0 : index
    %121 = vector.load %arg2[%c0_30, %c0_31, %c0_32] : memref<1x1x256xf32, #tpu.memory_space<vmem>>, vector<1x1x256xf32>
    %122 = vector.shape_cast %121 : vector<1x1x256xf32> to vector<1x256xf32>
    %123 = vector.broadcast %122 : vector<1x256xf32> to vector<4x256xf32>
    %124 = arith.mulf %123, %118 : vector<4x256xf32>
    %125 = arith.addf %120, %124 : vector<4x256xf32>
    %c0_33 = arith.constant 0 : index
    %c0_34 = arith.constant 0 : index
    %c0_35 = arith.constant 0 : index
    %126 = vector.load %arg6[%c0_33, %c0_34, %c0_35] : memref<1x4x256xf32, #tpu.memory_space<vmem>>, vector<1x4x256xf32>
    %127 = vector.shape_cast %126 : vector<1x4x256xf32> to vector<4x256xf32>
    %128 = vector.shape_cast %125 : vector<4x256xf32> to vector<1x4x256xf32>
    tpu.vector_store %arg6[%c0_33, %c0_34, %c0_35], %128 {strides = array<i32>} : memref<1x4x256xf32, #tpu.memory_space<vmem>>, vector<1x4x256xf32>,
    return
  }
  func.func @transform_0(%arg0: i32) -> (i32, i32, i32) {
    %c0_i32 = arith.constant 0 : i32
    %c0_i32_0 = arith.constant 0 : i32
    %c0_i32_1 = arith.constant 0 : i32
    return %arg0, %c0_i32, %c0_i32_0 : i32, i32, i32
  }
  func.func @transform_1(%arg0: i32) -> (i32, i32, i32) {
    %c0_i32 = arith.constant 0 : i32
    %c0_i32_0 = arith.constant 0 : i32
    %c0_i32_1 = arith.constant 0 : i32
    return %arg0, %c0_i32, %c0_i32_0 : i32, i32, i32
  }
  func.func @transform_2(%arg0: i32) -> (i32, i32) {
    %c0_i32 = arith.constant 0 : i32
    %c0_i32_0 = arith.constant 0 : i32
    %c0_i32_1 = arith.constant 0 : i32
    return %c0_i32, %c0_i32_0 : i32, i32
  }
  func.func @transform_3(%arg0: i32) -> (i32, i32) {
    %c0_i32 = arith.constant 0 : i32
    %c0_i32_0 = arith.constant 0 : i32
    %c0_i32_1 = arith.constant 0 : i32
    return %c0_i32, %c0_i32_0 : i32, i32
  }
  func.func @transform_4(%arg0: i32) -> (i32, i32) {
    %c0_i32 = arith.constant 0 : i32
    %c0_i32_0 = arith.constant 0 : i32
    %c0_i32_1 = arith.constant 0 : i32
    return %c0_i32, %c0_i32_0 : i32, i32
  }
  func.func @transform_5(%arg0: i32) -> (i32, i32, i32) {
    %c0_i32 = arith.constant 0 : i32
    %c0_i32_0 = arith.constant 0 : i32
    %c0_i32_1 = arith.constant 0 : i32
    return %arg0, %c0_i32, %c0_i32_0 : i32, i32, i32
  }
}

</mosaic_0001>

<llo_original>
// kernel: model_forward.1
$region0: #{model_forward.1}
  #allocation0 [shape = 'u32[]', space=smem, size = 0x4, offset = 0x4, fixed_abs, tag = 'smem constant byte address 0x4 - core index']
  #allocation1 [shape = 'u32[144,128]{1,0:T(1,128)}', space=vmem, size = 0x12000, scoped, tag = 'internal scratch']
  %s0 = inlined_call_operand.vmem [shape: f32[2,4,256], index: 0, kind: input, shape index: {}]
  %s1 = inlined_call_operand.vmem [shape: f32[2,1,256], index: 1, kind: input, shape index: {}]
  %s2 = inlined_call_operand.vmem [shape: bf16[8,72], index: 2, kind: input, shape index: {}]
  %s3 = inlined_call_operand.vmem [shape: f32[4,72], index: 3, kind: input, shape index: {}]
  %s4 = inlined_call_operand.vmem [shape: f32[4,1], index: 4, kind: input, shape index: {}]
  %s5 = inlined_call_operand.vmem [shape: f32[2,4,256], index: 5, kind: output, shape index: {}]
  %s6 = sld [smem:[#allocation0]]
  $region53: #{model_forward.1} parent=0
    _
  %s8 = ssub.s32 1, %s6
  %s9 = scalar_select 0, %s8, %s6
  loop: start=0, step=1, limit=4
  $region2: #{model_forward.1} parent=0 // loop_pre_header
    _
  $region3: #{model_forward.1} parent=0 // loop_header
    %s11 = sphi 0, %s15
    %p12 = scmp.ge.s32.totalorder %s11, 4
    %s21 = sphi 0, %s23
    %s24 = sphi 0, %s21
    %s25 = sphi 0, %s24
    %s41 = sphi 0, %s25
    %s47 = sphi 0, %s49
    %s50 = sphi 0, %s47
    %s51 = sphi 0, %s50
    %s67 = sphi 0, %s51
    %s71 = sphi 0, %s71
    %s73 = sphi 0, %s71
    %s74 = sphi 0, %s73
    %s88 = sphi 0, %s74
    %s92 = sphi 0, %s92
    %s94 = sphi 0, %s92
    %s95 = sphi 0, %s94
    %s109 = sphi 0, %s95
    %s113 = sphi 0, %s113
    %s115 = sphi 0, %s113
    %s116 = sphi 0, %s115
    %s130 = sphi 0, %s116
    %s136 = sphi 0, %s138
    %s139 = sphi 0, %s136
    %s140 = sphi 0, %s139
    %s156 = sphi 0, %s140
  $region4: #{model_forward.1} parent=0 // loop_header_branch
    %14 = sbr.rel (%p12) target = $region8
  $region5: #{model_forward.1} parent=0 // loop_body
    %s16 = ssub.s32 %s11, 1
    %s17 = ssub.s32 %s11, 2
    %s18 = sadd.s32 %s11, 1
    %s19 = ssub.s32 %s11, %s18
    %p20 = scmp.eq.s32.totalorder %s19, 0
    %s22 = sadd.s32 %s21, 1
    %s23 = scalar_select %p20, %s21, %s22
    %p26 = pneg %p20
    %p27 = scmp.eq.s32.totalorder %s11, 1
    %p28 = por %p26, %p27
    %p29 = scmp.ne.s32.totalorder %s21, %s24
    %p30 = scmp.eq.s32.totalorder %s11, 0
    %p31 = por %p29, %p30
    %p32 = scmp.ne.s32.totalorder %s21, %s24
    %p33 = scmp.eq.s32.totalorder %s16, 1
    %p34 = por %p32, %p33
    %p35 = scmp.ne.s32.totalorder %s24, %s25
    %p36 = scmp.eq.s32.totalorder %s16, 0
    %p37 = por %p35, %p36
    %p38 = scmp.ne.s32.totalorder %s24, %s25
    %p39 = scmp.eq.s32.totalorder %s17, 1
    %p40 = por %p38, %p39
    %p42 = scmp.ne.s32.totalorder %s25, %s41
    %p43 = scmp.eq.s32.totalorder %s17, 0
    %p44 = por %p42, %p43
    %s45 = ssub.s32 %s11, %s18
    %p46 = scmp.eq.s32.totalorder %s45, 0
    %s48 = sadd.s32 %s47, 1
    %s49 = scalar_select %p46, %s47, %s48
    %p52 = pneg %p46
    %p53 = scmp.eq.s32.totalorder %s11, 1
    %p54 = por %p52, %p53
    %p55 = scmp.ne.s32.totalorder %s47, %s50
    %p56 = scmp.eq.s32.totalorder %s11, 0
    %p57 = por %p55, %p56
    %p58 = scmp.ne.s32.totalorder %s47, %s50
    %p59 = scmp.eq.s32.totalorder %s16, 1
    %p60 = por %p58, %p59
    %p61 = scmp.ne.s32.totalorder %s50, %s51
    %p62 = scmp.eq.s32.totalorder %s16, 0
    %p63 = por %p61, %p62
    %p64 = scmp.ne.s32.totalorder %s50, %s51
    %p65 = scmp.eq.s32.totalorder %s17, 1
    %p66 = por %p64, %p65
    %p68 = scmp.ne.s32.totalorder %s51, %s67
    %p69 = scmp.eq.s32.totalorder %s17, 0
    %p70 = por %p68, %p69
    %s72 = sadd.s32 %s71, 1
    %p75 = scmp.eq.s32.totalorder %s11, 1
    %p76 = scmp.ne.s32.totalorder %s71, %s73
    %p77 = scmp.eq.s32.totalorder %s11, 0
    %p78 = por %p76, %p77
    %p79 = scmp.ne.s32.totalorder %s71, %s73
    %p80 = scmp.eq.s32.totalorder %s16, 1
    %p81 = por %p79, %p80
    %p82 = scmp.ne.s32.totalorder %s73, %s74
    %p83 = scmp.eq.s32.totalorder %s16, 0
    %p84 = por %p82, %p83
    %p85 = scmp.ne.s32.totalorder %s73, %s74
    %p86 = scmp.eq.s32.totalorder %s17, 1
    %p87 = por %p85, %p86
    %p89 = scmp.ne.s32.totalorder %s74, %s88
    %p90 = scmp.eq.s32.totalorder %s17, 0
    %p91 = por %p89, %p90
    %s93 = sadd.s32 %s92, 1
    %p96 = scmp.eq.s32.totalorder %s11, 1
    %p97 = scmp.ne.s32.totalorder %s92, %s94
    %p98 = scmp.eq.s32.totalorder %s11, 0
    %p99 = por %p97, %p98
    %p100 = scmp.ne.s32.totalorder %s92, %s94
    %p101 = scmp.eq.s32.totalorder %s16, 1
    %p102 = por %p100, %p101
    %p103 = scmp.ne.s32.totalorder %s94, %s95
    %p104 = scmp.eq.s32.totalorder %s16, 0
    %p105 = por %p103, %p104
    %p106 = scmp.ne.s32.totalorder %s94, %s95
    %p107 = scmp.eq.s32.totalorder %s17, 1
    %p108 = por %p106, %p107
    %p110 = scmp.ne.s32.totalorder %s95, %s109
    %p111 = scmp.eq.s32.totalorder %s17, 0
    %p112 = por %p110, %p111
    %s114 = sadd.s32 %s113, 1
    %p117 = scmp.eq.s32.totalorder %s11, 1
    %p118 = scmp.ne.s32.totalorder %s113, %s115
    %p119 = scmp.eq.s32.totalorder %s11, 0
    %p120 = por %p118, %p119
    %p121 = scmp.ne.s32.totalorder %s113, %s115
    %p122 = scmp.eq.s32.totalorder %s16, 1
    %p123 = por %p121, %p122
    %p124 = scmp.ne.s32.totalorder %s115, %s116
    %p125 = scmp.eq.s32.totalorder %s16, 0
    %p126 = por %p124, %p125
    %p127 = scmp.ne.s32.totalorder %s115, %s116
    %p128 = scmp.eq.s32.totalorder %s17, 1
    %p129 = por %p127, %p128
    %p131 = scmp.ne.s32.totalorder %s116, %s130
    %p132 = scmp.eq.s32.totalorder %s17, 0
    %p133 = por %p131, %p132
    %s134 = ssub.s32 %s11, %s18
    %p135 = scmp.eq.s32.totalorder %s134, 0
    %s137 = sadd.s32 %s136, 1
    %s138 = scalar_select %p135, %s136, %s137
    %p141 = pneg %p135
    %p142 = scmp.eq.s32.totalorder %s11, 1
    %p143 = por %p141, %p142
    %p144 = scmp.ne.s32.totalorder %s136, %s139
    %p145 = scmp.eq.s32.totalorder %s11, 0
    %p146 = por %p144, %p145
    %p147 = scmp.ne.s32.totalorder %s136, %s139
    %p148 = scmp.eq.s32.totalorder %s16, 1
    %p149 = por %p147, %p148
    %p150 = scmp.ne.s32.totalorder %s139, %s140
    %p151 = scmp.eq.s32.totalorder %s16, 0
    %p152 = por %p150, %p151
    %p153 = scmp.ne.s32.totalorder %s139, %s140
    %p154 = scmp.eq.s32.totalorder %s17, 1
    %p155 = por %p153, %p154
    %p157 = scmp.ne.s32.totalorder %s140, %s156
    %p158 = scmp.eq.s32.totalorder %s17, 0
    %p159 = por %p157, %p158
    %p160 = scmp.le.s32.totalorder 1, %s11
    %p161 = scmp.lt.s32.totalorder %s11, 3
    %p162 = pnand %p160, %p161
    %p163 = pneg %p162
    // Predicated region
    $region9: #{model_forward.1} parent=5 // pred_check
      _
    $region10: #{model_forward.1} parent=5 // pred_check_branch
      %165 = sbr.rel (%p162) target = $region12
    $region11: #{model_forward.1} parent=5 // pred_region
      %s166 = ssub.s32 %s11, 1
      // Predicated region
      $region13: #{model_forward.1} parent=11 // pred_check
        %p167 = pneg %p84
      $region14: #{model_forward.1} parent=11 // pred_check_branch
        %169 = sbr.rel (%p167) target = $region16
      $region15: #{model_forward.1} parent=11 // pred_region
        _
      $region16: #{model_forward.1} parent=11 // pred_fallthru
        _
      // Predicated region
      $region17: #{model_forward.1} parent=11 // pred_check
        %p170 = pneg %p105
      $region18: #{model_forward.1} parent=11 // pred_check_branch
        %172 = sbr.rel (%p170) target = $region20
      $region19: #{model_forward.1} parent=11 // pred_region
        _
      $region20: #{model_forward.1} parent=11 // pred_fallthru
        _
      // Predicated region
      $region21: #{model_forward.1} parent=11 // pred_check
        %p173 = pneg %p126
      $region22: #{model_forward.1} parent=11 // pred_check_branch
        %175 = sbr.rel (%p173) target = $region24
      $region23: #{model_forward.1} parent=11 // pred_region
        _
      $region24: #{model_forward.1} parent=11 // pred_fallthru
        _
    $region12: #{model_forward.1} parent=5 // pred_fallthru
      _
    %p176 = scmp.lt.s32.totalorder %s11, 2
    // Predicated region
    $region25: #{model_forward.1} parent=5 // pred_check
      %p177 = pneg %p176
    $region26: #{model_forward.1} parent=5 // pred_check_branch
      %179 = sbr.rel (%p177) target = $region28
    $region27: #{model_forward.1} parent=5 // pred_region
      // Predicated region
      $region29: #{model_forward.1} parent=27 // pred_check
        %p180 = pneg %p31
      $region30: #{model_forward.1} parent=27 // pred_check_branch
        %182 = sbr.rel (%p180) target = $region32
      $region31: #{model_forward.1} parent=27 // pred_region
        %p183 = scmp.lt.s32.totalorder %s11, 1
        %s184 = scalar_select %p183, %s11, 1
        %s185 = smul.addr %s184, 2
        %s186 = smul.addr %s185, 4
        %s187 = scalar_lea.vmem %s0, %s186
      $region32: #{model_forward.1} parent=27 // pred_fallthru
        _
      // Predicated region
      $region33: #{model_forward.1} parent=27 // pred_check
        %p188 = pneg %p57
      $region34: #{model_forward.1} parent=27 // pred_check_branch
        %190 = sbr.rel (%p188) target = $region36
      $region35: #{model_forward.1} parent=27 // pred_region
        %p191 = scmp.lt.s32.totalorder %s11, 1
        %s192 = scalar_select %p191, %s11, 1
        %s193 = smul.addr %s192, 2
        %s194 = scalar_lea.vmem %s1, %s193
      $region36: #{model_forward.1} parent=27 // pred_fallthru
        _
    $region28: #{model_forward.1} parent=5 // pred_fallthru
      _
    %p195 = scmp.le.s32.totalorder 1, %s11
    %p196 = scmp.lt.s32.totalorder %s11, 3
    %p197 = pnand %p195, %p196
    %p198 = pneg %p197
    // Predicated region
    $region37: #{model_forward.1} parent=5 // pred_check
      _
    $region38: #{model_forward.1} parent=5 // pred_check_branch
      %200 = sbr.rel (%p197) target = $region40
    $region39: #{model_forward.1} parent=5 // pred_region
      %s201 = ssub.s32 %s11, 1
      %p202 = scmp.lt.s32.totalorder %s16, 1
      %s203 = scalar_select %p202, %s16, 1
      %s204 = smul.addr %s203, 2
      %s205 = smul.addr %s204, 4
      %s206 = scalar_lea.vmem %s0, %s205
      %p207 = pneg %p37
      %p208 = pneg %p34
      %p209 = scmp.lt.s32.totalorder %s16, 1
      %s210 = scalar_select %p209, %s16, 1
      %s211 = smul.addr %s210, 2
      %s212 = scalar_lea.vmem %s1, %s211
      %p213 = pneg %p63
      %p214 = pneg %p60
      %p215 = pneg %p84
      %p216 = pneg %p81
      %p217 = pneg %p105
      %p218 = pneg %p102
      %p219 = pneg %p126
      %p220 = pneg %p123
      %p221 = pneg %p152
      %p222 = pneg %p149
      %p223 = scmp.lt.s32.totalorder %s16, 1
      %s224 = scalar_select %p223, %s16, 1
      %s225 = smul.addr %s224, 2
      %s226 = smul.addr %s225, 4
      %s227 = scalar_lea.vmem %s5, %s226
      %p228 = scmp.lt.s32.totalorder %s16, 1
      %s229 = scalar_select %p228, %s16, 1
      %s230 = smul.addr %s229, 2
      %s231 = smul.addr %s230, 4
      %s232 = scalar_lea.vmem %s0, %s231
      %p233 = scmp.lt.s32.totalorder %s16, 1
      %s234 = scalar_select %p233, %s16, 1
      %s235 = smul.addr %s234, 2
      %s236 = scalar_lea.vmem %s1, %s235
      %p237 = scmp.lt.s32.totalorder %s16, 1
      %s238 = scalar_select %p237, %s16, 1
      %s239 = smul.addr %s238, 2
      %s240 = smul.addr %s239, 4
      %s241 = scalar_lea.vmem %s5, %s240
      %v243 = vlaneseq
      %v244 = vand.u32 %v243, 127
      %v245 = vadd.s32 %v244, 128
      %vm246 = vcmp.lt.s32.totalorder %v244, 0
      %v247 = vsub.s32 0, %v244
      %v248 = vsel %vm246, %v247, %v244
      %v249 = vmul.u32.u64.compose %v248, 2863311531
      %v250 = vextract.low.u32 %v249
      %v251 = vextract.high.u32 %v249
      %v252 = vshrl.u32 %v251, 8
      %v253 = vmul.u32 %v252, 384
      %v254 = vsub.s32 %v248, %v253
      %v255 = vsub.s32 0, %v254
      %v256 = vsel %vm246, %v255, %v254
      %vm257 = vcmp.lt.s32.totalorder %v245, 0
      %v258 = vsub.s32 0, %v245
      %v259 = vsel %vm257, %v258, %v245
      %v260 = vmul.u32.u64.compose %v259, 2863311531
      %v261 = vextract.low.u32 %v260
      %v262 = vextract.high.u32 %v260
      %v263 = vshrl.u32 %v262, 8
      %v264 = vmul.u32 %v263, 384
      %v265 = vsub.s32 %v259, %v264
      %v266 = vsub.s32 0, %v265
      %v267 = vsel %vm257, %v266, %v265
      %vm268 = vcmp.ne.s32.totalorder %v256, 0
      %vm269 = vcmp.ne.s32.totalorder %v267, 0
      %vm270 = vcmp.lt.s32.totalorder %v256, 0
      %vm271 = vcmp.lt.s32.totalorder %v267, 0
      %vm272 = vmand %vm270, %vm268
      %vm273 = vmand %vm271, %vm269
      %v274 = vadd.s32 %v256, 384
      %v275 = vadd.s32 %v267, 384
      %v276 = vsel %vm272, %v274, %v256
      %v277 = vsel %vm273, %v275, %v267
      %vm278 = vcmp.lt.s32.totalorder %v276, 0
      %v279 = vsub.s32 0, %v276
      %v280 = vsel %vm278, %v279, %v276
      %v281 = vshrl.u32 %v280, 4
      %v282 = vand.u32 %v280, 15
      %v283 = vsub.s32 0, %v282
      %v284 = vsel %vm278, %v283, %v282
      %vm285 = vcmp.lt.s32.totalorder %v277, 0
      %v286 = vsub.s32 0, %v277
      %v287 = vsel %vm285, %v286, %v277
      %v288 = vshrl.u32 %v287, 4
      %v289 = vand.u32 %v287, 15
      %v290 = vsub.s32 0, %v289
      %v291 = vsel %vm285, %v290, %v289
      %vm292 = vcmp.ne.s32.totalorder %v284, 0
      %vm293 = vcmp.ne.s32.totalorder %v291, 0
      %vm294 = vcmp.lt.s32.totalorder %v284, 0
      %vm295 = vcmp.lt.s32.totalorder %v291, 0
      %vm296 = vmand %vm294, %vm292
      %vm297 = vmand %vm295, %vm293
      %v298 = vadd.s32 %v284, 16
      %v299 = vadd.s32 %v291, 16
      %v300 = vsel %vm296, %v298, %v284
      %v301 = vsel %vm297, %v299, %v291
      %vm302 = vcmp.ge.s32.totalorder %v300, 1
      %vm303 = vcmp.ge.s32.totalorder %v301, 1
      %v304 = vsel %vm302, 1, 0
      %v305 = vsel %vm303, 1, 0
      %v306 = vcvt.s32.f32 %v304
      %v307 = vcvt.s32.f32 %v305
      %vm308 = vcmp.le.s32.totalorder %v300, 14
      %vm309 = vcmp.le.s32.totalorder %v301, 14
      %v310 = vsel %vm308, 1, 0
      %v311 = vsel %vm309, 1, 0
      %v312 = vcvt.s32.f32 %v310
      %v313 = vcvt.s32.f32 %v311
      %v314 = vld [vmem:[%s232] sm:$0xff]
      %v315 = vld [vmem:[%s236] sm:$0x3]
      %v317 = vcombine.high %v314, %v314
      %v320 = vlaneseq
      %v321 = vshrl.u32 %v320, 7
      %v322 = vsub.s32 0, %v321
      %v323 = vrot.slane %v315, %v322
      %v324 = vlaneseq
      %v325 = vshrl.u32 %v324, 7
      %v326 = vsub.s32 1, %v325
      %v327 = vrot.slane %v315, %v326
      %v329 = vrot.slane 0.0, 4
      %v330 = vrot.slane %v323, 4
      %v331 = vrot.slane %v327, 4
      %vm335 = vcmask 1043456
      %v336 = vsel %vm335, 0.0, %v329
      %v337 = vsel %vm335, %v314, %v330
      %v338 = vsel %vm335, %v317, %v331
      %vm339 = vcmask 1044480
      %v340 = vsel %vm339, %v336, 1.0
      %v341 = vsel %vm339, %v337, 1.0
      %v342 = vsel %vm339, %v338, 1.0
      %vm343 = vcmask 1045504
      %v344 = vsel %vm343, %v340, 0.0
      %v345 = vsel %vm343, %v341, 0.0
      %v346 = vsel %vm343, %v342, 0.0
      %v347 = vpack.c.bf16 %v306, %v306
      %v348 = vpack.c.bf16 %v307, %v307
      %v349 = vpack.c.bf16 %v312, %v312
      %v350 = vpack.c.bf16 %v313, %v313
      %v351 = vpack.c.bf16 %v344, %v344
      %v352 = vpack.c.bf16 %v345, %v345
      %v353 = vpack.c.bf16 %v346, %v346
      %356 = vrot.lane.b32.xlu0 %v347, 111
      %v357 = vpop.permute.xlu0 %356
      %358 = vrot.lane.b32.xlu0 %v348, 111
      %v359 = vpop.permute.xlu0 %358
      %vm360 = vcmask 908288
      %v361 = vsel %vm360, %v357, %v359
      %v365 = vmul.bf16 %v351, %v357
      %v366 = vmul.bf16 %v352, %v361
      %v367 = vmul.bf16 %v353, %v359
      %370 = vrot.lane.b32.xlu0 %v349, 113
      %v371 = vpop.permute.xlu0 %370
      %372 = vrot.lane.b32.xlu0 %v350, 113
      %v373 = vpop.permute.xlu0 %372
      %vm374 = vcmask 924672
      %v375 = vsel %vm374, %v371, %v373
      %v379 = vmul.bf16 %v351, %v371
      %v380 = vmul.bf16 %v352, %v375
      %v381 = vmul.bf16 %v353, %v373
      %382 = vrot.lane.b32.xlu0 %v347, 127
      %v383 = vpop.permute.xlu0 %382
      %384 = vrot.lane.b32.xlu0 %v348, 127
      %v385 = vpop.permute.xlu0 %384
      %vm386 = vcmask 1039360
      %v387 = vsel %vm386, %v383, %v385
      %v391 = vmul.bf16 %v351, %v383
      %v392 = vmul.bf16 %v352, %v387
      %v393 = vmul.bf16 %v353, %v385
      %394 = vrot.lane.b32.xlu0 %v349, 1
      %v395 = vpop.permute.xlu0 %394
      %396 = vrot.lane.b32.xlu0 %v350, 1
      %v397 = vpop.permute.xlu0 %396
      %vm398 = vcmask 7168
      %v399 = vsel %vm398, %v395, %v397
      %v403 = vmul.bf16 %v352, %v395
      %v404 = vmul.bf16 %v353, %v399
      %v405 = vmul.bf16 %v351, %v397
      %406 = vrot.lane.b32.xlu0 %v347, 15
      %v407 = vpop.permute.xlu0 %406
      %408 = vrot.lane.b32.xlu0 %v348, 15
      %v409 = vpop.permute.xlu0 %408
      %vm410 = vcmask 121856
      %v411 = vsel %vm410, %v407, %v409
      %v415 = vmul.bf16 %v352, %v407
      %v416 = vmul.bf16 %v353, %v411
      %v417 = vmul.bf16 %v351, %v409
      %418 = vrot.lane.b32.xlu0 %v349, 17
      %v419 = vpop.permute.xlu0 %418
      %420 = vrot.lane.b32.xlu0 %v350, 17
      %v421 = vpop.permute.xlu0 %420
      %vm422 = vcmask 138240
      %v423 = vsel %vm422, %v419, %v421
      %v427 = vmul.bf16 %v352, %v419
      %v428 = vmul.bf16 %v353, %v423
      %v429 = vmul.bf16 %v351, %v421
      %v433 = vrot.slane %v351, 4
      %v434 = vrot.slane %v352, 4
      %v435 = vrot.slane %v353, 4
      %436 = vrot.lane.b32.xlu0 %v433, 127
      %v437 = vpop.permute.xlu0 %436
      %438 = vrot.lane.b32.xlu0 %v434, 127
      %v439 = vpop.permute.xlu0 %438
      %440 = vrot.lane.b32.xlu0 %v435, 127
      %v441 = vpop.permute.xlu0 %440
      %v442 = vsel %vm386, %v437, %v439
      %v443 = vsel %vm386, %v439, %v441
      %447 = vrot.lane.b32.xlu0 %v379, 126
      %v448 = vpop.permute.xlu0 %447
      %449 = vrot.lane.b32.xlu0 %v380, 126
      %v450 = vpop.permute.xlu0 %449
      %451 = vrot.lane.b32.xlu0 %v381, 126
      %v452 = vpop.permute.xlu0 %451
      %vm453 = vcmask 1031168
      %v454 = vsel %vm453, %v448, %v450
      %v455 = vsel %vm453, %v450, %v452
      %v459 = vrot.slane %v391, 4
      %v460 = vrot.slane %v392, 4
      %v461 = vrot.slane %v393, 4
      %462 = vrot.lane.b32.xlu0 %v459, 112
      %v463 = vpop.permute.xlu0 %462
      %464 = vrot.lane.b32.xlu0 %v460, 112
      %v465 = vpop.permute.xlu0 %464
      %466 = vrot.lane.b32.xlu0 %v461, 112
      %v467 = vpop.permute.xlu0 %466
      %vm468 = vcmask 916480
      %v469 = vsel %vm468, %v463, %v465
      %v470 = vsel %vm468, %v465, %v467
      %471 = vrot.lane.b32.xlu0 %v352, 111
      %v472 = vpop.permute.xlu0 %471
      %473 = vrot.lane.b32.xlu0 %v353, 111
      %v474 = vpop.permute.xlu0 %473
      %v475 = vsel %vm360, %v472, %v474
      %v479 = vrot.slane %v403, 4
      %v480 = vrot.slane %v404, 4
      %v481 = vrot.slane %v405, 4
      %482 = vrot.lane.b32.xlu0 %v479, 110
      %v483 = vpop.permute.xlu0 %482
      %484 = vrot.lane.b32.xlu0 %v480, 110
      %v485 = vpop.permute.xlu0 %484
      %486 = vrot.lane.b32.xlu0 %v481, 110
      %v487 = vpop.permute.xlu0 %486
      %vm488 = vcmask 900096
      %v489 = vsel %vm488, %v483, %v485
      %v490 = vsel %vm488, %v485, %v487
      %494 = vrot.lane.b32.xlu0 %v415, 96
      %v495 = vpop.permute.xlu0 %494
      %496 = vrot.lane.b32.xlu0 %v416, 96
      %v497 = vpop.permute.xlu0 %496
      %498 = vrot.lane.b32.xlu0 %v417, 96
      %v499 = vpop.permute.xlu0 %498
      %vm500 = vcmask 785408
      %v501 = vsel %vm500, %v495, %v497
      %v502 = vsel %vm500, %v497, %v499
      %503 = vrot.lane.b32.xlu0 %v434, 95
      %v504 = vpop.permute.xlu0 %503
      %505 = vrot.lane.b32.xlu0 %v435, 95
      %v506 = vpop.permute.xlu0 %505
      %507 = vrot.lane.b32.xlu0 %v433, 95
      %v508 = vpop.permute.xlu0 %507
      %vm509 = vcmask 777216
      %v510 = vsel %vm509, %v504, %v506
      %v511 = vsel %vm509, %v506, %v508
      %515 = vrot.lane.b32.xlu0 %v427, 94
      %v516 = vpop.permute.xlu0 %515
      %517 = vrot.lane.b32.xlu0 %v428, 94
      %v518 = vpop.permute.xlu0 %517
      %519 = vrot.lane.b32.xlu0 %v429, 94
      %v520 = vpop.permute.xlu0 %519
      %vm521 = vcmask 769024
      %v522 = vsel %vm521, %v516, %v518
      %v523 = vsel %vm521, %v518, %v520
      %v526 = vsel %vm335, %v365, %v442
      %v529 = vsel %vm335, %v366, %v443
      %v532 = vsel %vm335, %v367, %v441
      %v535 = vsel %vm335, %v454, %v469
      %v538 = vsel %vm335, %v455, %v470
      %v541 = vsel %vm335, %v452, %v467
      %v544 = vsel %vm335, %v472, %v483
      %v547 = vsel %vm335, %v475, %v489
      %v550 = vsel %vm335, %v474, %v490
      %v553 = vsel %vm335, %v495, %v504
      %v556 = vsel %vm335, %v501, %v510
      %v559 = vsel %vm335, %v502, %v511
      %v560 = vld [vmem:[%s2] sm:$0xf]
      %573 = vrot.lane.b32.xlu0 %v526, 17
      %v574 = vpop.permute.xlu0 %573
      %575 = vrot.lane.b32.xlu0 %v529, 17
      %v576 = vpop.permute.xlu0 %575
      %577 = vrot.lane.b32.xlu0 %v532, 17
      %v578 = vpop.permute.xlu0 %577
      %579 = vrot.lane.b32.xlu0 %v535, 17
      %v580 = vpop.permute.xlu0 %579
      %581 = vrot.lane.b32.xlu0 %v538, 17
      %v582 = vpop.permute.xlu0 %581
      %583 = vrot.lane.b32.xlu0 %v541, 17
      %v584 = vpop.permute.xlu0 %583
      %585 = vrot.lane.b32.xlu0 %v544, 17
      %v586 = vpop.permute.xlu0 %585
      %587 = vrot.lane.b32.xlu0 %v547, 17
      %v588 = vpop.permute.xlu0 %587
      %589 = vrot.lane.b32.xlu0 %v550, 17
      %v590 = vpop.permute.xlu0 %589
      %591 = vrot.lane.b32.xlu0 %v553, 17
      %v592 = vpop.permute.xlu0 %591
      %593 = vrot.lane.b32.xlu0 %v556, 17
      %v594 = vpop.permute.xlu0 %593
      %595 = vrot.lane.b32.xlu0 %v559, 17
      %v596 = vpop.permute.xlu0 %595
      %597 = vrot.lane.b32.xlu0 %v516, 17
      %v598 = vpop.permute.xlu0 %597
      %599 = vrot.lane.b32.xlu0 %v522, 17
      %v600 = vpop.permute.xlu0 %599
      %601 = vrot.lane.b32.xlu0 %v523, 17
      %v602 = vpop.permute.xlu0 %601
      %v603 = vsel %vm422, %v574, %v576
      %v604 = vsel %vm422, %v576, %v578
      %v605 = vsel %vm422, %v580, %v582
      %v606 = vsel %vm422, %v582, %v584
      %v607 = vsel %vm422, %v586, %v588
      %v608 = vsel %vm422, %v588, %v590
      %v609 = vsel %vm422, %v592, %v594
      %v610 = vsel %vm422, %v594, %v596
      %v611 = vsel %vm422, %v598, %v600
      %v612 = vsel %vm422, %v600, %v602
      %vm621 = vcmask 588800
      %v623 = vsel %vm621, %v560, 0
      %v626 = vsel %vm335, %v611, 0
      %v629 = vsel %vm335, %v612, 0
      %631 = vmatprep.subr.bf16.mxu0 %v604
      %632 = vmatpush1.bf16.msra.mxu0 %v603
      %633 = vmatprep.subr.bf16.mxu0 %v606
      %634 = vmatpush1.bf16.msra.mxu0 %v605
      %635 = vmatprep.subr.bf16.mxu0 %v608
      %636 = vmatpush1.bf16.msra.mxu0 %v607
      %637 = vmatprep.subr.bf16.mxu0 %v610
      %638 = vmatpush1.bf16.msra.mxu0 %v609
      %639 = vmatprep.subr.bf16.mxu0 %v629
      %640 = vmatpush1.bf16.msra.mxu0 %v626
      %641 = vmatprep.subr.bf16.mxu0 0
      %642 = vmatpush1.bf16.msra.mxu0 0
      %643 = vmatprep.subr.bf16.mxu0 0
      %644 = vmatpush1.bf16.msra.mxu0 0
      %645 = vmatprep.subr.bf16.mxu0 0
      %646 = vmatpush1.bf16.msra.mxu0 0
      %647 = vmatprep.subr.bf16.mxu0 0
      %648 = vmatpush1.bf16.msra.mxu0 0
      %649 = vmatprep.subr.bf16.mxu0 0
      %650 = vmatpush1.bf16.msra.mxu0 0
      %651 = vmatprep.subr.bf16.mxu0 0
      %652 = vmatpush1.bf16.msra.mxu0 0
      %653 = vmatprep.subr.bf16.mxu0 0
      %654 = vmatpush1.bf16.msra.mxu0 0
      %655 = vmatprep.subr.bf16.mxu0 0
      %656 = vmatpush1.bf16.msra.mxu0 0
      %657 = vmatprep.subr.bf16.mxu0 0
      %658 = vmatpush1.bf16.msra.mxu0 0
      %659 = vmatprep.subr.bf16.mxu0 0
      %660 = vmatpush1.bf16.msra.mxu0 0
      %661 = vmatprep.subr.bf16.mxu0 0
      %662 = vmatpush1.bf16.msra.mxu0 0
      %663 = vmatprep.mubr.bf16.mxu0 0
      %664 = vmatmul.mubr.bf16.gmra.mrb[0].mxu0 %v623
      %v665 = vpop.f32.mrb[0].mxu0
      %v666 = vadd.f32 0.0, %v665
      %v667 = vpop.f32.mrb[0].mxu0
      %v668 = vadd.f32 0.0, %v667
      %v669 = vpop.f32.mrb[0].mxu0
      %v670 = vpop.f32.mrb[0].mxu0
      %671 = vdwg.mxu0
      %v672 = vmax.f32 %v666, 0.0
      %v673 = vmax.f32 %v668, 0.0
      %676 = vrot.lane.b32.xlu0 %v306, 111
      %v677 = vpop.permute.xlu0 %676
      %678 = vrot.lane.b32.xlu0 %v307, 111
      %v679 = vpop.permute.xlu0 %678
      %vm680 = vcmask 908288
      %v681 = vsel %vm680, %v677, %v679
      %v685 = vmul.f32 %v677, 0.0
      %v686 = vmul.f32 %v672, %v681
      %v687 = vmul.f32 %v673, %v679
      %690 = vrot.lane.b32.xlu0 %v312, 113
      %v691 = vpop.permute.xlu0 %690
      %692 = vrot.lane.b32.xlu0 %v313, 113
      %v693 = vpop.permute.xlu0 %692
      %vm694 = vcmask 924672
      %v695 = vsel %vm694, %v691, %v693
      %v699 = vmul.f32 %v691, 0.0
      %v700 = vmul.f32 %v672, %v695
      %v701 = vmul.f32 %v673, %v693
      %702 = vrot.lane.b32.xlu0 %v306, 127
      %v703 = vpop.permute.xlu0 %702
      %704 = vrot.lane.b32.xlu0 %v307, 127
      %v705 = vpop.permute.xlu0 %704
      %vm706 = vcmask 1039360
      %v707 = vsel %vm706, %v703, %v705
      %v711 = vmul.f32 %v703, 0.0
      %v712 = vmul.f32 %v672, %v707
      %v713 = vmul.f32 %v673, %v705
      %714 = vrot.lane.b32.xlu0 %v312, 1
      %v715 = vpop.permute.xlu0 %714
      %716 = vrot.lane.b32.xlu0 %v313, 1
      %v717 = vpop.permute.xlu0 %716
      %vm718 = vcmask 7168
      %v719 = vsel %vm718, %v715, %v717
      %v723 = vmul.f32 %v672, %v715
      %v724 = vmul.f32 %v673, %v719
      %v725 = vmul.f32 %v717, 0.0
      %726 = vrot.lane.b32.xlu0 %v306, 15
      %v727 = vpop.permute.xlu0 %726
      %728 = vrot.lane.b32.xlu0 %v307, 15
      %v729 = vpop.permute.xlu0 %728
      %vm730 = vcmask 121856
      %v731 = vsel %vm730, %v727, %v729
      %v735 = vmul.f32 %v672, %v727
      %v736 = vmul.f32 %v673, %v731
      %v737 = vmul.f32 %v729, 0.0
      %738 = vrot.lane.b32.xlu0 %v312, 17
      %v739 = vpop.permute.xlu0 %738
      %740 = vrot.lane.b32.xlu0 %v313, 17
      %v741 = vpop.permute.xlu0 %740
      %vm742 = vcmask 138240
      %v743 = vsel %vm742, %v739, %v741
      %v747 = vmul.f32 %v672, %v739
      %v748 = vmul.f32 %v673, %v743
      %v749 = vmul.f32 %v741, 0.0
      %752 = vrot.lane.b32.xlu0 0.0, 127
      %v753 = vpop.permute.xlu0 %752
      %754 = vrot.lane.b32.xlu0 %v672, 127
      %v755 = vpop.permute.xlu0 %754
      %756 = vrot.lane.b32.xlu0 %v673, 127
      %v757 = vpop.permute.xlu0 %756
      %v758 = vsel %vm706, %v753, %v755
      %v759 = vsel %vm706, %v755, %v757
      %763 = vrot.lane.b32.xlu0 %v699, 126
      %v764 = vpop.permute.xlu0 %763
      %765 = vrot.lane.b32.xlu0 %v700, 126
      %v766 = vpop.permute.xlu0 %765
      %767 = vrot.lane.b32.xlu0 %v701, 126
      %v768 = vpop.permute.xlu0 %767
      %vm769 = vcmask 1031168
      %v770 = vsel %vm769, %v764, %v766
      %v771 = vsel %vm769, %v766, %v768
      %775 = vrot.lane.b32.xlu0 %v711, 112
      %v776 = vpop.permute.xlu0 %775
      %777 = vrot.lane.b32.xlu0 %v712, 112
      %v778 = vpop.permute.xlu0 %777
      %779 = vrot.lane.b32.xlu0 %v713, 112
      %v780 = vpop.permute.xlu0 %779
      %vm781 = vcmask 916480
      %v782 = vsel %vm781, %v776, %v778
      %v783 = vsel %vm781, %v778, %v780
      %784 = vrot.lane.b32.xlu0 %v672, 111
      %v785 = vpop.permute.xlu0 %784
      %786 = vrot.lane.b32.xlu0 %v673, 111
      %v787 = vpop.permute.xlu0 %786
      %v788 = vsel %vm680, %v785, %v787
      %792 = vrot.lane.b32.xlu0 %v723, 110
      %v793 = vpop.permute.xlu0 %792
      %794 = vrot.lane.b32.xlu0 %v724, 110
      %v795 = vpop.permute.xlu0 %794
      %796 = vrot.lane.b32.xlu0 %v725, 110
      %v797 = vpop.permute.xlu0 %796
      %vm798 = vcmask 900096
      %v799 = vsel %vm798, %v793, %v795
      %v800 = vsel %vm798, %v795, %v797
      %804 = vrot.lane.b32.xlu0 %v735, 96
      %v805 = vpop.permute.xlu0 %804
      %806 = vrot.lane.b32.xlu0 %v736, 96
      %v807 = vpop.permute.xlu0 %806
      %808 = vrot.lane.b32.xlu0 %v737, 96
      %v809 = vpop.permute.xlu0 %808
      %vm810 = vcmask 785408
      %v811 = vsel %vm810, %v805, %v807
      %v812 = vsel %vm810, %v807, %v809
      %813 = vrot.lane.b32.xlu0 %v672, 95
      %v814 = vpop.permute.xlu0 %813
      %815 = vrot.lane.b32.xlu0 %v673, 95
      %v816 = vpop.permute.xlu0 %815
      %817 = vrot.lane.b32.xlu0 0.0, 95
      %v818 = vpop.permute.xlu0 %817
      %vm819 = vcmask 777216
      %v820 = vsel %vm819, %v814, %v816
      %v821 = vsel %vm819, %v816, %v818
      %825 = vrot.lane.b32.xlu0 %v747, 94
      %v826 = vpop.permute.xlu0 %825
      %827 = vrot.lane.b32.xlu0 %v748, 94
      %v828 = vpop.permute.xlu0 %827
      %829 = vrot.lane.b32.xlu0 %v749, 94
      %v830 = vpop.permute.xlu0 %829
      %vm831 = vcmask 769024
      %v832 = vsel %vm831, %v826, %v828
      %v833 = vsel %vm831, %v828, %v830
      %v834 = vld [vmem:[%s3] sm:$0xf]
      %v835 = vld [vmem:[%s4] sm:$0xf]
      %837 = vset.pattern.permute.xlu0 0
      %838 = vperm.xlu0 %837, %v835
      %v839 = vpop.permute.xlu0 %838
      %844 = vrot.lane.b32.xlu0 %v685, 17
      %v845 = vpop.permute.xlu0 %844
      %846 = vrot.lane.b32.xlu0 %v686, 17
      %v847 = vpop.permute.xlu0 %846
      %848 = vrot.lane.b32.xlu0 %v687, 17
      %v849 = vpop.permute.xlu0 %848
      %850 = vrot.lane.b32.xlu0 %v758, 17
      %v851 = vpop.permute.xlu0 %850
      %852 = vrot.lane.b32.xlu0 %v759, 17
      %v853 = vpop.permute.xlu0 %852
      %854 = vrot.lane.b32.xlu0 %v757, 17
      %v855 = vpop.permute.xlu0 %854
      %856 = vrot.lane.b32.xlu0 %v770, 17
      %v857 = vpop.permute.xlu0 %856
      %858 = vrot.lane.b32.xlu0 %v771, 17
      %v859 = vpop.permute.xlu0 %858
      %860 = vrot.lane.b32.xlu0 %v768, 17
      %v861 = vpop.permute.xlu0 %860
      %862 = vrot.lane.b32.xlu0 %v782, 17
      %v863 = vpop.permute.xlu0 %862
      %864 = vrot.lane.b32.xlu0 %v783, 17
      %v865 = vpop.permute.xlu0 %864
      %866 = vrot.lane.b32.xlu0 %v780, 17
      %v867 = vpop.permute.xlu0 %866
      %868 = vrot.lane.b32.xlu0 %v785, 17
      %v869 = vpop.permute.xlu0 %868
      %870 = vrot.lane.b32.xlu0 %v788, 17
      %v871 = vpop.permute.xlu0 %870
      %872 = vrot.lane.b32.xlu0 %v787, 17
      %v873 = vpop.permute.xlu0 %872
      %874 = vrot.lane.b32.xlu0 %v793, 17
      %v875 = vpop.permute.xlu0 %874
      %876 = vrot.lane.b32.xlu0 %v799, 17
      %v877 = vpop.permute.xlu0 %876
      %878 = vrot.lane.b32.xlu0 %v800, 17
      %v879 = vpop.permute.xlu0 %878
      %880 = vrot.lane.b32.xlu0 %v805, 17
      %v881 = vpop.permute.xlu0 %880
      %882 = vrot.lane.b32.xlu0 %v811, 17
      %v883 = vpop.permute.xlu0 %882
      %884 = vrot.lane.b32.xlu0 %v812, 17
      %v885 = vpop.permute.xlu0 %884
      %886 = vrot.lane.b32.xlu0 %v814, 17
      %v887 = vpop.permute.xlu0 %886
      %888 = vrot.lane.b32.xlu0 %v820, 17
      %v889 = vpop.permute.xlu0 %888
      %890 = vrot.lane.b32.xlu0 %v821, 17
      %v891 = vpop.permute.xlu0 %890
      %892 = vrot.lane.b32.xlu0 %v826, 17
      %v893 = vpop.permute.xlu0 %892
      %894 = vrot.lane.b32.xlu0 %v832, 17
      %v895 = vpop.permute.xlu0 %894
      %896 = vrot.lane.b32.xlu0 %v833, 17
      %v897 = vpop.permute.xlu0 %896
      %v898 = vsel %vm742, %v845, %v847
      %v899 = vsel %vm742, %v847, %v849
      %v900 = vsel %vm742, %v851, %v853
      %v901 = vsel %vm742, %v853, %v855
      %v902 = vsel %vm742, %v857, %v859
      %v903 = vsel %vm742, %v859, %v861
      %v904 = vsel %vm742, %v863, %v865
      %v905 = vsel %vm742, %v865, %v867
      %v906 = vsel %vm742, %v869, %v871
      %v907 = vsel %vm742, %v871, %v873
      %v908 = vsel %vm742, %v875, %v877
      %v909 = vsel %vm742, %v877, %v879
      %v910 = vsel %vm742, %v881, %v883
      %v911 = vsel %vm742, %v883, %v885
      %v912 = vsel %vm742, %v887, %v889
      %v913 = vsel %vm742, %v889, %v891
      %v914 = vsel %vm742, %v893, %v895
      %v915 = vsel %vm742, %v895, %v897
      %v935 = vsel %vm621, %v834, 0
      %937 = vmatprep.subr.mxu0 %v899
      %938 = vmatpush1.msra.mxu0 %v898
      %939 = vmatprep.subr.mxu0 %v901
      %940 = vmatpush1.msra.mxu0 %v900
      %941 = vmatprep.subr.mxu0 %v903
      %942 = vmatpush1.msra.mxu0 %v902
      %943 = vmatprep.subr.mxu0 %v905
      %944 = vmatpush1.msra.mxu0 %v904
      %945 = vmatprep.subr.mxu0 %v907
      %946 = vmatpush1.msra.mxu0 %v906
      %947 = vmatprep.subr.mxu0 %v909
      %948 = vmatpush1.msra.mxu0 %v908
      %949 = vmatprep.subr.mxu0 %v911
      %950 = vmatpush1.msra.mxu0 %v910
      %951 = vmatprep.subr.mxu0 %v913
      %952 = vmatpush1.msra.mxu0 %v912
      %953 = vmatprep.subr.mxu0 %v915
      %954 = vmatpush1.msra.mxu0 %v914
      %955 = vmatprep.subr.mxu0 0.0
      %956 = vmatpush1.msra.mxu0 0.0
      %957 = vmatprep.subr.mxu0 0.0
      %958 = vmatpush1.msra.mxu0 0.0
      %959 = vmatprep.subr.mxu0 0.0
      %960 = vmatpush1.msra.mxu0 0.0
      %961 = vmatprep.subr.mxu0 0.0
      %962 = vmatpush1.msra.mxu0 0.0
      %963 = vmatprep.subr.mxu0 0.0
      %964 = vmatpush1.msra.mxu0 0.0
      %965 = vmatprep.subr.mxu0 0.0
      %966 = vmatpush1.msra.mxu0 0.0
      %967 = vmatprep.subr.mxu0 0.0
      %968 = vmatpush1.msra.mxu0 0.0
      %969 = vmatprep.subr.mxu0 0.0
      %970 = vmatpush1.msra.mxu0 0.0
      %971 = vmatprep.subr.mxu0 0.0
      %972 = vmatpush1.msra.mxu0 0.0
      %973 = vmatprep.subr.mxu0 0.0
      %974 = vmatpush1.msra.mxu0 0.0
      %975 = vmatprep.subr.mxu0 0.0
      %976 = vmatpush1.msra.mxu0 0.0
      %977 = vmatprep.subr.mxu0 0.0
      %978 = vmatpush1.msra.mxu0 0.0
      %979 = vmatprep.subr.mxu0 0.0
      %980 = vmatpush1.msra.mxu0 0.0
      %981 = vmatprep.subr.mxu0 0.0
      %982 = vmatpush1.msra.mxu0 0.0
      %983 = vmatprep.subr.mxu0 0.0
      %984 = vmatpush1.msra.mxu0 0.0
      %985 = vmatprep.subr.mxu0 0.0
      %986 = vmatpush1.msra.mxu0 0.0
      %987 = vmatprep.subr.mxu0 0.0
      %988 = vmatpush1.msra.mxu0 0.0
      %989 = vmatprep.subr.mxu0 0.0
      %990 = vmatpush1.msra.mxu0 0.0
      %991 = vmatprep.subr.mxu0 0.0
      %992 = vmatpush1.msra.mxu0 0.0
      %993 = vmatprep.subr.mxu0 0.0
      %994 = vmatpush1.msra.mxu0 0.0
      %995 = vmatprep.subr.mxu0 0.0
      %996 = vmatpush1.msra.mxu0 0.0
      %997 = vmatprep.subr.mxu0 0.0
      %998 = vmatpush1.msra.mxu0 0.0
      %999 = vmatprep.subr.mxu0 0.0
      %1000 = vmatpush1.msra.mxu0 0.0
      %1001 = vmatprep.mubr.f32.mxu0 0.0
      %1002 = vmatmul.mubr.f32.gmra.mrb[0].mxu0 %v935
      %v1003 = vpop.f32.mrb[0].mxu0
      %v1004 = vadd.f32 %v839, %v1003
      %v1005 = vpop.f32.mrb[0].mxu0
      %v1006 = vadd.f32 %v839, %v1005
      %1007 = vdwg.mxu0
      %v1008 = vtanh.pop %v1004
      %v1009 = vtanh.pop %v1006
      %v1012 = vmul.f32 %v323, %v1008
      %v1013 = vmul.f32 %v327, %v1009
      %v1016 = vcombine.low %v1012, %v1013
      %v1018 = vadd.f32 %v314, %v1016
      %1019 = vst [vmem:[%s241] sm:$0xff] %v1018
      %p1020 = scmp.lt.s32.totalorder %s16, 1
      %s1021 = scalar_select %p1020, %s16, 1
      %s1022 = smul.addr %s1021, 2
      %s1023 = smul.addr %s1022, 4
      %s1024 = scalar_lea.vmem %s5, %s1023
      // Predicated region
      $region41: #{model_forward.1} parent=39 // pred_check
        %p1025 = pneg %p149
      $region42: #{model_forward.1} parent=39 // pred_check_branch
        %1027 = sbr.rel (%p1025) target = $region44
      $region43: #{model_forward.1} parent=39 // pred_region
        _
      $region44: #{model_forward.1} parent=39 // pred_fallthru
        _
    $region40: #{model_forward.1} parent=5 // pred_fallthru
      _
    %p1028 = scmp.le.s32.totalorder 2, %s11
    // Predicated region
    $region45: #{model_forward.1} parent=5 // pred_check
      %p1029 = pneg %p1028
    $region46: #{model_forward.1} parent=5 // pred_check_branch
      %1031 = sbr.rel (%p1029) target = $region48
    $region47: #{model_forward.1} parent=5 // pred_region
      %s1032 = ssub.s32 %s11, 2
      // Predicated region
      $region49: #{model_forward.1} parent=47 // pred_check
        %p1033 = pneg %p155
      $region50: #{model_forward.1} parent=47 // pred_check_branch
        %1035 = sbr.rel (%p1033) target = $region52
      $region51: #{model_forward.1} parent=47 // pred_region
        %p1036 = scmp.lt.s32.totalorder %s17, 1
        %s1037 = scalar_select %p1036, %s17, 1
        %s1038 = smul.addr %s1037, 2
        %s1039 = smul.addr %s1038, 4
        %s1040 = scalar_lea.vmem %s5, %s1039
      $region52: #{model_forward.1} parent=47 // pred_fallthru
        _
    $region48: #{model_forward.1} parent=5 // pred_fallthru
      _
  $region6: #{model_forward.1} parent=0 // loop_footer
    %s15 = sadd.s32 1, %s11
  $region7: #{model_forward.1} parent=0 // loop_footer_branch
    %10 = sbr.rel target = $region3
  $region8: #{model_forward.1} parent=0 // loop_exit
    _

</llo_original>
